<compile_context>
chip_gen: v7x
topology: tpu7x:2x2x1
jax: 0.10.0
libtpu: 0.0.40
codegen_flags: <defaults>
</compile_context>

<pallas_src>
import jax
import jax.numpy as jnp
import numpy as np
from jax.experimental import pallas as pl
from jax.experimental.pallas import tpu as pltpu

EPS = 1e-5
LANE = 128
SUB = 8


def _round_up(x, m):
    return (x + m - 1) // m * m


def _choose_tiles(hw, kp8, cp8, n_batch):
    """Pick a lane-dense row tile (multiple of 128) under a per-step VMEM budget."""
    hwp = _round_up(hw, LANE)
    tile_budget = 8 * 1024 * 1024                      # double-buffered tiles, safe on all chips
    tm = LANE
    for t in (1024, 512, 256, 128):
        if hwp % t == 0 and (2 * (kp8 + cp8) * t + kp8 * cp8) * 4 <= tile_budget:
            tm = t
            break
    mt = hwp // tm
    tile_bytes = (2 * (kp8 + cp8) * tm + kp8 * cp8) * 4
    y_bytes = n_batch * mt * cp8 * tm * 4              # full conv output cached in VMEM (Option A)
    cache_y = (y_bytes + tile_bytes) <= 24 * 1024 * 1024   # well under v7x's 32 MiB scoped VMEM
    return hwp, tm, mt, cache_y


def _make_cell_kernel(n_batch, hw, tm, mt, eps, cache_y):
    """Fused conv + BatchNorm kernel. Grid = (phase, batch, hw_tile), all sequential."""
    total = float(n_batch * hw)

    def kernel(w_ref, p_ref, g_ref, b_ref, o_ref, sum_sc, m2_sc, *rest):
        y_sc = rest[0] if cache_y else None
        phase = pl.program_id(0)
        n = pl.program_id(1)
        m = pl.program_id(2)
        t = n * mt + m

        def conv_tile():
            # (Cout_p8, Kp8) @ (Kp8, TM) -> (Cout_p8, TM), lane axis = spatial.
            return jnp.dot(w_ref[...], p_ref[0], preferred_element_type=jnp.float32)

        @pl.when(jnp.logical_and(phase == 0, jnp.logical_and(n == 0, m == 0)))
        def _init():
            sum_sc[...] = jnp.zeros_like(sum_sc)
            m2_sc[...] = jnp.zeros_like(m2_sc)

        @pl.when(phase == 0)
        def _stats():
            y = conv_tile()
            if cache_y:
                y_sc[t] = y
            # Lane-validity mask for a possibly padded last spatial tile.
            valid = jnp.minimum(tm, hw - m * tm)
            lane = jax.lax.broadcasted_iota(jnp.int32, y.shape, 1)
            mask = lane < valid
            cnt = valid.astype(jnp.float32)
            ym = jnp.where(mask, y, 0.0)
            tsum = jnp.sum(ym, axis=1, keepdims=True)            # (Cout_p8, 1)
            tmean = tsum / cnt
            dev = jnp.where(mask, y - tmean, 0.0)
            tm2 = jnp.sum(dev * dev, axis=1, keepdims=True)
            # Chan's incremental combine of (sum, M2): avoids E[y^2]-E[y]^2 cancellation.
            cbf = (n * hw + m * tm).astype(jnp.float32)          # elements seen so far
            run_mean = sum_sc[...] / jnp.maximum(cbf, 1.0)
            delta = tmean - run_mean
            m2_sc[...] = m2_sc[...] + tm2 + delta * delta * (cbf * cnt / (cbf + cnt))
            sum_sc[...] = sum_sc[...] + tsum

        @pl.when(phase == 1)
        def _apply():
            mean = sum_sc[...] / total
            var = m2_sc[...] / total                              # biased batch variance
            scale = g_ref[...] * jax.lax.rsqrt(var + eps)
            shift = b_ref[...] - mean * scale
            yy = y_sc[t] if cache_y else conv_tile()
            o_ref[0] = (yy * scale + shift).astype(o_ref.dtype)

    return kernel


def cell_forward(x_nchw, weight_oihw, mask_oihw, gamma, beta, padding=1, eps=EPS):
    """Cell.forward: conv2d(x, weight*mask, stride=1, groups=1, dilation=1, bias=None) + BN (train)."""
    # TODO(synk): stride/groups/dilation other than the Cell defaults (1, 1, 1) not implemented.
    # TODO(synk): BatchNorm running_mean/running_var buffers are not updated (batch stats only).
    # TODO(synk): bf16 patches/weight would halve HBM bytes but misses the 1e-4 f32 parity; kept f32.
    n_b, cin, h, w_sp = x_nchw.shape
    cout, _, kh, kw = weight_oihw.shape
    ho = h + 2 * padding - (kh - 1)
    wo = w_sp + 2 * padding - (kw - 1)
    hw = ho * wo
    kdim = kh * kw * cin
    kp8 = _round_up(kdim, SUB)                 # contraction padded only to the sublane width
    cp8 = _round_up(cout, SUB)                 # output channels padded only to the sublane width
    hwp, tm, mt, cache_y = _choose_tiles(hw, kp8, cp8, n_b)

    f32 = jnp.float32

    # ---- wrapper: layout plumbing only (stays NCHW; kernel output lands directly in NCHW) ----
    xp = jnp.pad(x_nchw.astype(f32),
                 ((0, 0), (0, 0), (padding, padding), (padding, padding)))
    cols = [xp[:, :, i:i + ho, j:j + wo].reshape(n_b, cin, hw)
            for i in range(kh) for j in range(kw)]
    patches = jnp.concatenate(cols, axis=1)                       # (N, K*K*Cin, HW), tap-major/Cin-minor
    patches = jnp.pad(patches, ((0, 0), (0, kp8 - kdim), (0, hwp - hw)))

    wmat = (weight_oihw * mask_oihw.astype(weight_oihw.dtype)).astype(f32)
    wmat = jnp.transpose(wmat, (0, 2, 3, 1)).reshape(cout, kdim)  # matches patch row ordering
    wmat = jnp.pad(wmat, ((0, cp8 - cout), (0, kp8 - kdim)))

    gamma_p = jnp.pad(gamma.astype(f32), (0, cp8 - cout)).reshape(cp8, 1)
    beta_p = jnp.pad(beta.astype(f32), (0, cp8 - cout)).reshape(cp8, 1)

    if cache_y:
        # Phase 1 reads the cached conv output: pin the patch DMA to one block.
        patch_map = lambda p, n, m: (n * (1 - p), 0, m * (1 - p))
    else:
        # Phase 1 recomputes the cheap matmul: fetch the real tile in both phases.
        patch_map = lambda p, n, m: (n, 0, m)

    scratch = [pltpu.VMEM((cp8, 1), f32),                         # running channel sum
               pltpu.VMEM((cp8, 1), f32)]                         # running channel M2
    if cache_y:
        scratch.append(pltpu.VMEM((n_b * mt, cp8, tm), f32))      # cached conv output (Option A)

    kernel = _make_cell_kernel(n_b, hw, tm, mt, eps, cache_y)

    out_p = pl.pallas_call(
        kernel,
        grid=(2, n_b, mt),
        in_specs=[
            pl.BlockSpec((cp8, kp8), lambda p, n, m: (0, 0)),     # masked weight (resident)
            pl.BlockSpec((1, kp8, tm), patch_map),                # im2col patches
            pl.BlockSpec((cp8, 1), lambda p, n, m: (0, 0)),       # gamma
            pl.BlockSpec((cp8, 1), lambda p, n, m: (0, 0)),       # beta
        ],
        # Phase 0 parks the (unwritten) output on block 0; phase 1 writes every block once.
        out_specs=pl.BlockSpec((1, cp8, tm), lambda p, n, m: (n * p, 0, m * p)),
        out_shape=jax.ShapeDtypeStruct((n_b, cp8, hwp), x_nchw.dtype),
        scratch_shapes=scratch,
        compiler_params=pltpu.CompilerParams(
            dimension_semantics=("arbitrary", "arbitrary", "arbitrary"),
            vmem_limit_bytes=32 * 1024 * 1024,
        ),
    )(wmat, patches, gamma_p, beta_p)

    # Slice off channel / spatial padding; already NCHW.
    return out_p[:, :cout, :hw].reshape(n_b, cout, ho, wo)


def _reference(x, weight, mask, gamma, beta, padding=1, eps=EPS):
    """Pure-JAX reference of the same forward pass (for correctness check)."""
    w = weight * mask.astype(weight.dtype)
    y = jax.lax.conv_general_dilated(
        x, w, window_strides=(1, 1),
        padding=((padding, padding), (padding, padding)),
        dimension_numbers=("NCHW", "OIHW", "NCHW"))
    mean = jnp.mean(y, axis=(0, 2, 3), keepdims=True)
    var = jnp.mean((y - mean) ** 2, axis=(0, 2, 3), keepdims=True)
    yhat = (y - mean) * jax.lax.rsqrt(var + eps)
    return yhat * gamma.reshape(1, -1, 1, 1) + beta.reshape(1, -1, 1, 1)


if __name__ == "__main__":
    # Cell(inplanes=4, planes=8, kernel_size=3, stride=1, padding=1, bias=False)
    N, Cin, Cout, H, W, K = 2, 4, 8, 16, 16, 3

    key = jax.random.PRNGKey(0)
    kx, kw_, km, kg, kb = jax.random.split(key, 5)
    x = jax.random.normal(kx, (N, Cin, H, W), dtype=jnp.float32)
    weight = jax.random.normal(kw_, (Cout, Cin, K, K), dtype=jnp.float32) * 0.1
    mask = jax.random.uniform(km, (Cout, Cin, K, K)) > 0.2        # pruning mask (bool)
    gamma = 1.0 + 0.1 * jax.random.normal(kg, (Cout,), dtype=jnp.float32)   # BN weight
    beta = 0.1 * jax.random.normal(kb, (Cout,), dtype=jnp.float32)          # BN bias
    # Conv2d(bias=False): `self.conv.bias` is None in the module; no bias term.

    fwd = jax.jit(cell_forward, static_argnames=("padding", "eps"))
    out = jax.block_until_ready(fwd(x, weight, mask, gamma, beta))
    ref = jax.block_until_ready(_reference(x, weight, mask, gamma, beta))

    assert out.shape == (N, Cout, H, W), out.shape
    err = float(np.max(np.abs(np.asarray(out) - np.asarray(ref))))
    assert np.allclose(np.asarray(out), np.asarray(ref), atol=1e-4, rtol=1e-4), err

    print("KERNEL_OK")
</pallas_src>

<mosaic_0001>
module attributes {stable_mosaic.version = 11 : i64} {
  func.func @kernel(%arg0: i32, %arg1: i32, %arg2: i32, %arg3: memref<8x40xf32, #tpu.memory_space<vmem>>, %arg4: memref<1x40x256xf32, #tpu.memory_space<vmem>>, %arg5: memref<8x1xf32, #tpu.memory_space<vmem>>, %arg6: memref<8x1xf32, #tpu.memory_space<vmem>>, %arg7: memref<1x8x256xf32, #tpu.memory_space<vmem>>, %arg8: memref<8x1xf32, #tpu.memory_space<vmem>>, %arg9: memref<8x1xf32, #tpu.memory_space<vmem>>, %arg10: memref<2x8x256xf32, #tpu.memory_space<vmem>>) attributes {dimension_semantics = [#tpu.dimension_semantics<arbitrary>, #tpu.dimension_semantics<arbitrary>, #tpu.dimension_semantics<arbitrary>], iteration_bounds = array<i64: 2, 2, 1>, scalar_prefetch = 0 : i64, scratch_operands = 3 : i64, tpu.core_type = #tpu.core_type<tc>, window_params = [{pipeline_mode = #tpu.pipeline_mode<synchronous>, transform_indices = @transform_0, window_bounds = array<i64: 8, 40>}, {transform_indices = @transform_1, window_bounds = array<i64: 1, 40, 256>}, {pipeline_mode = #tpu.pipeline_mode<synchronous>, transform_indices = @transform_2, window_bounds = array<i64: 8, 1>}, {pipeline_mode = #tpu.pipeline_mode<synchronous>, transform_indices = @transform_3, window_bounds = array<i64: 8, 1>}, {transform_indices = @transform_4, window_bounds = array<i64: 1, 8, 256>}]} {
    %c1_i32 = arith.constant 1 : i32
    %0 = arith.muli %arg1, %c1_i32 : i32
    %1 = arith.addi %0, %arg2 : i32
    %c0_i32 = arith.constant 0 : i32
    %2 = arith.cmpi eq, %arg0, %c0_i32 : i32
    %c0_i32_0 = arith.constant 0 : i32
    %3 = arith.cmpi eq, %arg1, %c0_i32_0 : i32
    %c0_i32_1 = arith.constant 0 : i32
    %4 = arith.cmpi eq, %arg2, %c0_i32_1 : i32
    %5 = arith.andi %3, %4 : i1
    %6 = arith.andi %2, %5 : i1
    %7 = arith.extui %6 : i1 to i32
    %c0_i32_2 = arith.constant 0 : i32
    %8 = arith.cmpi ne, %7, %c0_i32_2 : i32
    scf.if %8 {
      %cst = arith.constant 0.000000e+00 : f32
      %15 = vector.broadcast %cst : f32 to vector<8x1xf32>
      %c0 = arith.constant 0 : index
      %c0_7 = arith.constant 0 : index
      %16 = vector.load %arg8[%c0, %c0_7] : memref<8x1xf32, #tpu.memory_space<vmem>>, vector<8x1xf32>
      tpu.vector_store %arg8[%c0, %c0_7], %15 {strides = array<i32>} : memref<8x1xf32, #tpu.memory_space<vmem>>, vector<8x1xf32>,
      %cst_8 = arith.constant 0.000000e+00 : f32
      %17 = vector.broadcast %cst_8 : f32 to vector<8x1xf32>
      %c0_9 = arith.constant 0 : index
      %c0_10 = arith.constant 0 : index
      %18 = vector.load %arg9[%c0_9, %c0_10] : memref<8x1xf32, #tpu.memory_space<vmem>>, vector<8x1xf32>
      tpu.vector_store %arg9[%c0_9, %c0_10], %17 {strides = array<i32>} : memref<8x1xf32, #tpu.memory_space<vmem>>, vector<8x1xf32>,
    } else {
    }
    %c0_i32_3 = arith.constant 0 : i32
    %9 = arith.cmpi eq, %arg0, %c0_i32_3 : i32
    %10 = arith.extui %9 : i1 to i32
    %c0_i32_4 = arith.constant 0 : i32
    %11 = arith.cmpi ne, %10, %c0_i32_4 : i32
    scf.if %11 {
      %c0 = arith.constant 0 : index
      %c0_7 = arith.constant 0 : index
      %15 = vector.load %arg3[%c0, %c0_7] : memref<8x40xf32, #tpu.memory_space<vmem>>, vector<8x40xf32>
      %c0_8 = arith.constant 0 : index
      %c0_9 = arith.constant 0 : index
      %c0_10 = arith.constant 0 : index
      %16 = vector.load %arg4[%c0_8, %c0_9, %c0_10] : memref<1x40x256xf32, #tpu.memory_space<vmem>>, vector<1x40x256xf32>
      %17 = vector.shape_cast %16 : vector<1x40x256xf32> to vector<40x256xf32>
      %cst = arith.constant dense<0.000000e+00> : vector<8x256xf32>
      %18 = tpu.matmul %15, %17, %cst {dimension_numbers = #tpu.dot_dimension_numbers<[1], [0], [0], [1], [0, 0, 1, 1], [], []>} : vector<8x40xf32>, vector<40x256xf32>, vector<8x256xf32> -> vector<8x256xf32>
      %19 = arith.index_cast %1 : i32 to index
      %c0_11 = arith.constant 0 : index
      %c0_12 = arith.constant 0 : index
      %20 = vector.load %arg10[%19, %c0_11, %c0_12] : memref<2x8x256xf32, #tpu.memory_space<vmem>>, vector<1x8x256xf32>
      %21 = vector.shape_cast %20 : vector<1x8x256xf32> to vector<8x256xf32>
      %22 = vector.shape_cast %18 : vector<8x256xf32> to vector<1x8x256xf32>
      tpu.vector_store %arg10[%19, %c0_11, %c0_12], %22 {strides = array<i32>} : memref<2x8x256xf32, #tpu.memory_space<vmem>>, vector<1x8x256xf32>,
      %c256_i32 = arith.constant 256 : i32
      %23 = arith.muli %arg2, %c256_i32 : i32
      %c256_i32_13 = arith.constant 256 : i32
      %24 = arith.subi %c256_i32_13, %23 : i32
      %c256_i32_14 = arith.constant 256 : i32
      %25 = arith.minsi %c256_i32_14, %24 : i32
      %26 = tpu.iota {dimensions = array<i32: 1>} : vector<8x256xi32>
      %27 = vector.broadcast %25 : i32 to vector<8x256xi32>
      %28 = arith.cmpi slt, %26, %27 : vector<8x256xi32>
      %29 = arith.sitofp %25 : i32 to f32
      %cst_15 = arith.constant 0.000000e+00 : f32
      %30 = vector.broadcast %cst_15 : f32 to vector<8x256xf32>
      %31 = arith.select %28, %18, %30 : vector<8x256xi1>, vector<8x256xf32>
      %cst_16 = arith.constant dense<0.000000e+00> : vector<8xf32>
      %32 = vector.multi_reduction <add>, %31, %cst_16 [1] : vector<8x256xf32> to vector<8xf32>
      %33 = vector.shape_cast %32 : vector<8xf32> to vector<8x1xf32>
      %34 = vector.broadcast %29 : f32 to vector<8x1xf32>
      %35 = arith.divf %33, %34 : vector<8x1xf32>
      %36 = vector.broadcast %35 : vector<8x1xf32> to vector<8x256xf32>
      %37 = arith.subf %18, %36 : vector<8x256xf32>
      %cst_17 = arith.constant 0.000000e+00 : f32
      %38 = vector.broadcast %cst_17 : f32 to vector<8x256xf32>
      %39 = arith.select %28, %37, %38 : vector<8x256xi1>, vector<8x256xf32>
      %40 = arith.mulf %39, %39 : vector<8x256xf32>
      %cst_18 = arith.constant dense<0.000000e+00> : vector<8xf32>
      %41 = vector.multi_reduction <add>, %40, %cst_18 [1] : vector<8x256xf32> to vector<8xf32>
      %42 = vector.shape_cast %41 : vector<8xf32> to vector<8x1xf32>
      %c256_i32_19 = arith.constant 256 : i32
      %43 = arith.muli %arg1, %c256_i32_19 : i32
      %c256_i32_20 = arith.constant 256 : i32
      %44 = arith.muli %arg2, %c256_i32_20 : i32
      %45 = arith.addi %43, %44 : i32
      %46 = arith.sitofp %45 : i32 to f32
      %c0_21 = arith.constant 0 : index
      %c0_22 = arith.constant 0 : index
      %47 = vector.load %arg8[%c0_21, %c0_22] : memref<8x1xf32, #tpu.memory_space<vmem>>, vector<8x1xf32>
      %cst_23 = arith.constant 1.000000e+00 : f32
      %48 = arith.maximumf %46, %cst_23 : f32
      %49 = vector.broadcast %48 : f32 to vector<8x1xf32>
      %50 = arith.divf %47, %49 : vector<8x1xf32>
      %51 = arith.subf %35, %50 : vector<8x1xf32>
      %c0_24 = arith.constant 0 : index
      %c0_25 = arith.constant 0 : index
      %52 = vector.load %arg9[%c0_24, %c0_25] : memref<8x1xf32, #tpu.memory_space<vmem>>, vector<8x1xf32>
      %53 = arith.addf %52, %42 : vector<8x1xf32>
      %54 = arith.mulf %51, %51 : vector<8x1xf32>
      %55 = arith.mulf %46, %29 : f32
      %56 = arith.addf %46, %29 : f32
      %57 = arith.divf %55, %56 : f32
      %58 = vector.broadcast %57 : f32 to vector<8x1xf32>
      %59 = arith.mulf %54, %58 : vector<8x1xf32>
      %60 = arith.addf %53, %59 : vector<8x1xf32>
      %c0_26 = arith.constant 0 : index
      %c0_27 = arith.constant 0 : index
      %61 = vector.load %arg9[%c0_26, %c0_27] : memref<8x1xf32, #tpu.memory_space<vmem>>, vector<8x1xf32>
      tpu.vector_store %arg9[%c0_26, %c0_27], %60 {strides = array<i32>} : memref<8x1xf32, #tpu.memory_space<vmem>>, vector<8x1xf32>,
      %c0_28 = arith.constant 0 : index
      %c0_29 = arith.constant 0 : index
      %62 = vector.load %arg8[%c0_28, %c0_29] : memref<8x1xf32, #tpu.memory_space<vmem>>, vector<8x1xf32>
      %63 = arith.addf %62, %33 : vector<8x1xf32>
      %c0_30 = arith.constant 0 : index
      %c0_31 = arith.constant 0 : index
      %64 = vector.load %arg8[%c0_30, %c0_31] : memref<8x1xf32, #tpu.memory_space<vmem>>, vector<8x1xf32>
      tpu.vector_store %arg8[%c0_30, %c0_31], %63 {strides = array<i32>} : memref<8x1xf32, #tpu.memory_space<vmem>>, vector<8x1xf32>,
    } else {
    }
    %c1_i32_5 = arith.constant 1 : i32
    %12 = arith.cmpi eq, %arg0, %c1_i32_5 : i32
    %13 = arith.extui %12 : i1 to i32
    %c0_i32_6 = arith.constant 0 : i32
    %14 = arith.cmpi ne, %13, %c0_i32_6 : i32
    scf.if %14 {
      %c0 = arith.constant 0 : index
      %c0_7 = arith.constant 0 : index
      %15 = vector.load %arg8[%c0, %c0_7] : memref<8x1xf32, #tpu.memory_space<vmem>>, vector<8x1xf32>
      %cst = arith.constant 5.120000e+02 : f32
      %16 = vector.broadcast %cst : f32 to vector<8x1xf32>
      %17 = arith.divf %15, %16 : vector<8x1xf32>
      %c0_8 = arith.constant 0 : index
      %c0_9 = arith.constant 0 : index
      %18 = vector.load %arg9[%c0_8, %c0_9] : memref<8x1xf32, #tpu.memory_space<vmem>>, vector<8x1xf32>
      %cst_10 = arith.constant 5.120000e+02 : f32
      %19 = vector.broadcast %cst_10 : f32 to vector<8x1xf32>
      %20 = arith.divf %18, %19 : vector<8x1xf32>
      %c0_11 = arith.constant 0 : index
      %c0_12 = arith.constant 0 : index
      %21 = vector.load %arg5[%c0_11, %c0_12] : memref<8x1xf32, #tpu.memory_space<vmem>>, vector<8x1xf32>
      %cst_13 = arith.constant 9.99999974E-6 : f32
      %22 = vector.broadcast %cst_13 : f32 to vector<8x1xf32>
      %23 = arith.addf %20, %22 : vector<8x1xf32>
      %24 = math.rsqrt %23 : vector<8x1xf32>
      %25 = arith.mulf %21, %24 : vector<8x1xf32>
      %c0_14 = arith.constant 0 : index
      %c0_15 = arith.constant 0 : index
      %26 = vector.load %arg6[%c0_14, %c0_15] : memref<8x1xf32, #tpu.memory_space<vmem>>, vector<8x1xf32>
      %27 = arith.mulf %17, %25 : vector<8x1xf32>
      %28 = arith.subf %26, %27 : vector<8x1xf32>
      %29 = arith.index_cast %1 : i32 to index
      %c0_16 = arith.constant 0 : index
      %c0_17 = arith.constant 0 : index
      %30 = vector.load %arg10[%29, %c0_16, %c0_17] : memref<2x8x256xf32, #tpu.memory_space<vmem>>, vector<1x8x256xf32>
      %31 = vector.shape_cast %30 : vector<1x8x256xf32> to vector<8x256xf32>
      %32 = vector.broadcast %25 : vector<8x1xf32> to vector<8x256xf32>
      %33 = arith.mulf %31, %32 : vector<8x256xf32>
      %34 = vector.broadcast %28 : vector<8x1xf32> to vector<8x256xf32>
      %35 = arith.addf %33, %34 : vector<8x256xf32>
      %c0_18 = arith.constant 0 : index
      %c0_19 = arith.constant 0 : index
      %c0_20 = arith.constant 0 : index
      %36 = vector.load %arg7[%c0_18, %c0_19, %c0_20] : memref<1x8x256xf32, #tpu.memory_space<vmem>>, vector<1x8x256xf32>
      %37 = vector.shape_cast %36 : vector<1x8x256xf32> to vector<8x256xf32>
      %38 = vector.shape_cast %35 : vector<8x256xf32> to vector<1x8x256xf32>
      tpu.vector_store %arg7[%c0_18, %c0_19, %c0_20], %38 {strides = array<i32>} : memref<1x8x256xf32, #tpu.memory_space<vmem>>, vector<1x8x256xf32>,
    } else {
    }
    return
  }
  func.func @transform_0(%arg0: i32, %arg1: i32, %arg2: i32) -> (i32, i32) {
    %c0_i32 = arith.constant 0 : i32
    %c0_i32_0 = arith.constant 0 : i32
    %c0_i32_1 = arith.constant 0 : i32
    return %c0_i32, %c0_i32_0 : i32, i32
  }
  func.func @transform_1(%arg0: i32, %arg1: i32, %arg2: i32) -> (i32, i32, i32) {
    %c1_i32 = arith.constant 1 : i32
    %0 = arith.subi %c1_i32, %arg0 : i32
    %1 = arith.muli %arg1, %0 : i32
    %c1_i32_0 = arith.constant 1 : i32
    %2 = arith.subi %c1_i32_0, %arg0 : i32
    %3 = arith.muli %arg2, %2 : i32
    %c0_i32 = arith.constant 0 : i32
    %c0_i32_1 = arith.constant 0 : i32
    return %1, %c0_i32, %3 : i32, i32, i32
  }
  func.func @transform_2(%arg0: i32, %arg1: i32, %arg2: i32) -> (i32, i32) {
    %c0_i32 = arith.constant 0 : i32
    %c0_i32_0 = arith.constant 0 : i32
    %c0_i32_1 = arith.constant 0 : i32
    return %c0_i32, %c0_i32_0 : i32, i32
  }
  func.func @transform_3(%arg0: i32, %arg1: i32, %arg2: i32) -> (i32, i32) {
    %c0_i32 = arith.constant 0 : i32
    %c0_i32_0 = arith.constant 0 : i32
    %c0_i32_1 = arith.constant 0 : i32
    return %c0_i32, %c0_i32_0 : i32, i32
  }
  func.func @transform_4(%arg0: i32, %arg1: i32, %arg2: i32) -> (i32, i32, i32) {
    %0 = arith.muli %arg1, %arg0 : i32
    %1 = arith.muli %arg2, %arg0 : i32
    %c0_i32 = arith.constant 0 : i32
    %c0_i32_0 = arith.constant 0 : i32
    return %0, %c0_i32, %1 : i32, i32, i32
  }
}

</mosaic_0001>

<llo_original>
// kernel: cell_forward.1
$region0: #{cell_forward.1}
  #allocation0 [shape = 'u32[]', space=smem, size = 0x4, offset = 0x4, fixed_abs, tag = 'smem constant byte address 0x4 - core index']
  #allocation1 [shape = 'u32[144,128]{1,0:T(1,128)}', space=vmem, size = 0x12000, scoped, tag = 'internal scratch']
  #allocation2 [shape = 'f32[8,1]{1,0:T(8,128)}', space=vmem, size = 0x1000, scoped, tag = 'scratch operand']
  #allocation3 [shape = 'f32[8,1]{1,0:T(8,128)}', space=vmem, size = 0x1000, scoped, tag = 'scratch operand']
  #allocation4 [shape = 'f32[2,8,256]{2,1,0:T(8,128)}', space=vmem, size = 0x4000, scoped, tag = 'scratch operand']
  %s0 = inlined_call_operand.vmem [shape: f32[8,40], index: 0, kind: input, shape index: {}]
  %s1 = inlined_call_operand.vmem [shape: f32[2,40,256], index: 1, kind: input, shape index: {}]
  %s2 = inlined_call_operand.vmem [shape: f32[8,1], index: 2, kind: input, shape index: {}]
  %s3 = inlined_call_operand.vmem [shape: f32[8,1], index: 3, kind: input, shape index: {}]
  %s4 = inlined_call_operand.vmem [shape: f32[2,8,256], index: 4, kind: output, shape index: {}]
  %s5 = sld [smem:[#allocation0]]
  $region61: #{cell_forward.1} parent=0
    _
  %s7 = ssub.s32 1, %s5
  %s8 = scalar_select 0, %s7, %s5
  loop: start=0, step=1, limit=6
  $region2: #{cell_forward.1} parent=0 // loop_pre_header
    _
  $region3: #{cell_forward.1} parent=0 // loop_header
    %s10 = sphi 0, %s14
    %p11 = scmp.ge.s32.totalorder %s10, 6
    %s17 = sphi 0, %s36
    %s18 = sphi 0, %s32
    %s19 = sphi 0, %s28
    %s20 = sphi 0, %s17
    %s21 = sphi 0, %s18
    %s22 = sphi 0, %s19
    %s23 = sphi 0, %s20
    %s24 = sphi 0, %s21
    %s25 = sphi 0, %s22
    %s37 = sphi 0, %s37
    %s39 = sphi 0, %s37
    %s40 = sphi 0, %s39
    %s54 = sphi 0, %s40
    %s68 = sphi 0, %s70
    %s71 = sphi 0, %s68
    %s72 = sphi 0, %s71
    %s88 = sphi 0, %s72
    %s92 = sphi 0, %s92
    %s94 = sphi 0, %s92
    %s95 = sphi 0, %s94
    %s109 = sphi 0, %s95
    %s113 = sphi 0, %s113
    %s115 = sphi 0, %s113
    %s116 = sphi 0, %s115
    %s130 = sphi 0, %s116
    %s142 = sphi 0, %s144
    %s145 = sphi 0, %s142
    %s146 = sphi 0, %s145
    %s162 = sphi 0, %s146
  $region4: #{cell_forward.1} parent=0 // loop_header_branch
    %13 = sbr.rel (%p11) target = $region8
  $region5: #{cell_forward.1} parent=0 // loop_body
    %s15 = ssub.s32 %s10, 1
    %s16 = ssub.s32 %s10, 2
    %s26 = sadd.s32 1, %s19
    %p27 = scmp.ge.s32.totalorder %s26, 1
    %s28 = scalar_select %p27, 0, %s26
    %s29 = sadd.s32 1, %s18
    %s30 = scalar_select %p27, %s29, %s18
    %p31 = scmp.ge.s32.totalorder %s30, 2
    %s32 = scalar_select %p31, 0, %s30
    %s33 = sadd.s32 1, %s17
    %s34 = scalar_select %p31, %s33, %s17
    %p35 = scmp.ge.s32.totalorder %s34, 2
    %s36 = scalar_select %p35, 0, %s34
    %s38 = sadd.s32 %s37, 1
    %p41 = scmp.eq.s32.totalorder %s10, 3
    %p42 = scmp.ne.s32.totalorder %s37, %s39
    %p43 = scmp.eq.s32.totalorder %s10, 0
    %p44 = por %p42, %p43
    %p45 = scmp.ne.s32.totalorder %s37, %s39
    %p46 = scmp.eq.s32.totalorder %s15, 3
    %p47 = por %p45, %p46
    %p48 = scmp.ne.s32.totalorder %s39, %s40
    %p49 = scmp.eq.s32.totalorder %s15, 0
    %p50 = por %p48, %p49
    %p51 = scmp.ne.s32.totalorder %s39, %s40
    %p52 = scmp.eq.s32.totalorder %s16, 3
    %p53 = por %p51, %p52
    %p55 = scmp.ne.s32.totalorder %s40, %s54
    %p56 = scmp.eq.s32.totalorder %s16, 0
    %p57 = por %p55, %p56
    %s58 = ssub.s32 1, %s17
    %s59 = smul.u32 %s18, %s58
    %s60 = smul.u32 %s19, %s58
    %s61 = ssub.s32 1, %s36
    %s62 = smul.u32 %s32, %s61
    %s63 = smul.u32 %s28, %s61
    %s64 = ssub.s32 %s59, %s62
    %s65 = ssub.s32 %s60, %s63
    %s66 = sor.u32 %s64, %s65
    %p67 = scmp.eq.s32.totalorder %s66, 0
    %s69 = sadd.s32 %s68, 1
    %s70 = scalar_select %p67, %s68, %s69
    %p73 = pneg %p67
    %p74 = scmp.eq.s32.totalorder %s10, 3
    %p75 = por %p73, %p74
    %p76 = scmp.ne.s32.totalorder %s68, %s71
    %p77 = scmp.eq.s32.totalorder %s10, 0
    %p78 = por %p76, %p77
    %p79 = scmp.ne.s32.totalorder %s68, %s71
    %p80 = scmp.eq.s32.totalorder %s15, 3
    %p81 = por %p79, %p80
    %p82 = scmp.ne.s32.totalorder %s71, %s72
    %p83 = scmp.eq.s32.totalorder %s15, 0
    %p84 = por %p82, %p83
    %p85 = scmp.ne.s32.totalorder %s71, %s72
    %p86 = scmp.eq.s32.totalorder %s16, 3
    %p87 = por %p85, %p86
    %p89 = scmp.ne.s32.totalorder %s72, %s88
    %p90 = scmp.eq.s32.totalorder %s16, 0
    %p91 = por %p89, %p90
    %s93 = sadd.s32 %s92, 1
    %p96 = scmp.eq.s32.totalorder %s10, 3
    %p97 = scmp.ne.s32.totalorder %s92, %s94
    %p98 = scmp.eq.s32.totalorder %s10, 0
    %p99 = por %p97, %p98
    %p100 = scmp.ne.s32.totalorder %s92, %s94
    %p101 = scmp.eq.s32.totalorder %s15, 3
    %p102 = por %p100, %p101
    %p103 = scmp.ne.s32.totalorder %s94, %s95
    %p104 = scmp.eq.s32.totalorder %s15, 0
    %p105 = por %p103, %p104
    %p106 = scmp.ne.s32.totalorder %s94, %s95
    %p107 = scmp.eq.s32.totalorder %s16, 3
    %p108 = por %p106, %p107
    %p110 = scmp.ne.s32.totalorder %s95, %s109
    %p111 = scmp.eq.s32.totalorder %s16, 0
    %p112 = por %p110, %p111
    %s114 = sadd.s32 %s113, 1
    %p117 = scmp.eq.s32.totalorder %s10, 3
    %p118 = scmp.ne.s32.totalorder %s113, %s115
    %p119 = scmp.eq.s32.totalorder %s10, 0
    %p120 = por %p118, %p119
    %p121 = scmp.ne.s32.totalorder %s113, %s115
    %p122 = scmp.eq.s32.totalorder %s15, 3
    %p123 = por %p121, %p122
    %p124 = scmp.ne.s32.totalorder %s115, %s116
    %p125 = scmp.eq.s32.totalorder %s15, 0
    %p126 = por %p124, %p125
    %p127 = scmp.ne.s32.totalorder %s115, %s116
    %p128 = scmp.eq.s32.totalorder %s16, 3
    %p129 = por %p127, %p128
    %p131 = scmp.ne.s32.totalorder %s116, %s130
    %p132 = scmp.eq.s32.totalorder %s16, 0
    %p133 = por %p131, %p132
    %s134 = smul.u32 %s18, %s17
    %s135 = smul.u32 %s19, %s17
    %s136 = smul.u32 %s32, %s36
    %s137 = smul.u32 %s28, %s36
    %s138 = ssub.s32 %s134, %s136
    %s139 = ssub.s32 %s135, %s137
    %s140 = sor.u32 %s138, %s139
    %p141 = scmp.eq.s32.totalorder %s140, 0
    %s143 = sadd.s32 %s142, 1
    %s144 = scalar_select %p141, %s142, %s143
    %p147 = pneg %p141
    %p148 = scmp.eq.s32.totalorder %s10, 3
    %p149 = por %p147, %p148
    %p150 = scmp.ne.s32.totalorder %s142, %s145
    %p151 = scmp.eq.s32.totalorder %s10, 0
    %p152 = por %p150, %p151
    %p153 = scmp.ne.s32.totalorder %s142, %s145
    %p154 = scmp.eq.s32.totalorder %s15, 3
    %p155 = por %p153, %p154
    %p156 = scmp.ne.s32.totalorder %s145, %s146
    %p157 = scmp.eq.s32.totalorder %s15, 0
    %p158 = por %p156, %p157
    %p159 = scmp.ne.s32.totalorder %s145, %s146
    %p160 = scmp.eq.s32.totalorder %s16, 3
    %p161 = por %p159, %p160
    %p163 = scmp.ne.s32.totalorder %s146, %s162
    %p164 = scmp.eq.s32.totalorder %s16, 0
    %p165 = por %p163, %p164
    %p166 = scmp.le.s32.totalorder 1, %s10
    %p167 = scmp.lt.s32.totalorder %s10, 5
    %p168 = pnand %p166, %p167
    %p169 = pneg %p168
    // Predicated region
    $region9: #{cell_forward.1} parent=5 // pred_check
      _
    $region10: #{cell_forward.1} parent=5 // pred_check_branch
      %171 = sbr.rel (%p168) target = $region12
    $region11: #{cell_forward.1} parent=5 // pred_region
      %s172 = ssub.s32 %s10, 1
      // Predicated region
      $region13: #{cell_forward.1} parent=11 // pred_check
        %p173 = pneg %p50
      $region14: #{cell_forward.1} parent=11 // pred_check_branch
        %175 = sbr.rel (%p173) target = $region16
      $region15: #{cell_forward.1} parent=11 // pred_region
        _
      $region16: #{cell_forward.1} parent=11 // pred_fallthru
        _
      // Predicated region
      $region17: #{cell_forward.1} parent=11 // pred_check
        %p176 = pneg %p105
      $region18: #{cell_forward.1} parent=11 // pred_check_branch
        %178 = sbr.rel (%p176) target = $region20
      $region19: #{cell_forward.1} parent=11 // pred_region
        _
      $region20: #{cell_forward.1} parent=11 // pred_fallthru
        _
      // Predicated region
      $region21: #{cell_forward.1} parent=11 // pred_check
        %p179 = pneg %p126
      $region22: #{cell_forward.1} parent=11 // pred_check_branch
        %181 = sbr.rel (%p179) target = $region24
      $region23: #{cell_forward.1} parent=11 // pred_region
        _
      $region24: #{cell_forward.1} parent=11 // pred_fallthru
        _
    $region12: #{cell_forward.1} parent=5 // pred_fallthru
      _
    %p182 = scmp.lt.s32.totalorder %s10, 4
    // Predicated region
    $region25: #{cell_forward.1} parent=5 // pred_check
      %p183 = pneg %p182
    $region26: #{cell_forward.1} parent=5 // pred_check_branch
      %185 = sbr.rel (%p183) target = $region28
    $region27: #{cell_forward.1} parent=5 // pred_region
      // Predicated region
      $region29: #{cell_forward.1} parent=27 // pred_check
        %p186 = pneg %p78
      $region30: #{cell_forward.1} parent=27 // pred_check_branch
        %188 = sbr.rel (%p186) target = $region32
      $region31: #{cell_forward.1} parent=27 // pred_region
        %s189 = ssub.s32 1, %s17
        %s190 = smul.u32 %s18, %s189
        %s191 = smul.u32 %s19, %s189
        %s192 = smul.u32 2, %s191
        %p193 = scmp.lt.s32.totalorder %s190, 1
        %s194 = scalar_select %p193, %s190, 1
        %p195 = scmp.lt.s32.totalorder %s192, 1
        %s196 = scalar_select %p195, %s192, 1
        %s197 = smul.addr %s194, 10
        %s198 = sadd.s32 %s196, %s197
        %s199 = smul.addr %s198, 8
        %s200 = scalar_lea.vmem %s1, %s199
        %s201 = ssub.s32 1, %s17
        %s202 = smul.u32 %s18, %s201
        %s203 = smul.u32 %s19, %s201
        %s204 = smul.u32 2, %s203
      $region32: #{cell_forward.1} parent=27 // pred_fallthru
        _
    $region28: #{cell_forward.1} parent=5 // pred_fallthru
      _
    %p205 = scmp.le.s32.totalorder 1, %s10
    %p206 = scmp.lt.s32.totalorder %s10, 5
    %p207 = pnand %p205, %p206
    %p208 = pneg %p207
    // Predicated region
    $region33: #{cell_forward.1} parent=5 // pred_check
      _
    $region34: #{cell_forward.1} parent=5 // pred_check_branch
      %210 = sbr.rel (%p207) target = $region36
    $region35: #{cell_forward.1} parent=5 // pred_region
      %s211 = ssub.s32 %s10, 1
      %p212 = pneg %p50
      %p213 = pneg %p47
      %s214 = ssub.s32 1, %s20
      %s215 = smul.u32 %s21, %s214
      %s216 = smul.u32 %s22, %s214
      %s217 = smul.u32 2, %s216
      %p218 = scmp.lt.s32.totalorder %s215, 1
      %s219 = scalar_select %p218, %s215, 1
      %p220 = scmp.lt.s32.totalorder %s217, 1
      %s221 = scalar_select %p220, %s217, 1
      %s222 = smul.addr %s219, 10
      %s223 = sadd.s32 %s221, %s222
      %s224 = smul.addr %s223, 8
      %s225 = scalar_lea.vmem %s1, %s224
      %p226 = pneg %p84
      %p227 = pneg %p81
      %p228 = pneg %p105
      %p229 = pneg %p102
      %p230 = pneg %p126
      %p231 = pneg %p123
      %p232 = pneg %p158
      %p233 = pneg %p155
      %s234 = smul.u32 %s21, %s20
      %s235 = smul.u32 %s22, %s20
      %s236 = smul.u32 2, %s235
      %p237 = scmp.lt.s32.totalorder %s234, 1
      %s238 = scalar_select %p237, %s234, 1
      %p239 = scmp.lt.s32.totalorder %s236, 1
      %s240 = scalar_select %p239, %s236, 1
      %s241 = smul.addr %s238, 2
      %s242 = sadd.s32 %s240, %s241
      %s243 = smul.addr %s242, 8
      %s244 = scalar_lea.vmem %s4, %s243
      %s245 = ssub.s32 1, %s20
      %s246 = smul.u32 %s21, %s245
      %s247 = smul.u32 %s22, %s245
      %s248 = smul.u32 2, %s247
      %p249 = scmp.lt.s32.totalorder %s246, 1
      %s250 = scalar_select %p249, %s246, 1
      %p251 = scmp.lt.s32.totalorder %s248, 1
      %s252 = scalar_select %p251, %s248, 1
      %s253 = smul.addr %s250, 10
      %s254 = sadd.s32 %s252, %s253
      %s255 = smul.addr %s254, 8
      %s256 = scalar_lea.vmem %s1, %s255
      %s257 = ssub.s32 1, %s20
      %s258 = smul.u32 %s21, %s257
      %s259 = smul.u32 %s22, %s257
      %s260 = smul.u32 2, %s259
      %s261 = smul.u32 %s21, %s20
      %s262 = smul.u32 %s22, %s20
      %s263 = smul.u32 2, %s262
      %p264 = scmp.lt.s32.totalorder %s261, 1
      %s265 = scalar_select %p264, %s261, 1
      %p266 = scmp.lt.s32.totalorder %s263, 1
      %s267 = scalar_select %p266, %s263, 1
      %s268 = smul.addr %s265, 2
      %s269 = sadd.s32 %s267, %s268
      %s270 = smul.addr %s269, 8
      %s271 = scalar_lea.vmem %s4, %s270
      %s272 = smul.u32 %s21, %s20
      %s273 = smul.u32 %s22, %s20
      %s274 = smul.u32 2, %s273
      %s275 = sadd.s32 %s21, %s22
      %p276 = scmp.eq.s32.totalorder %s20, 0
      %p277 = scmp.eq.s32.totalorder %s21, 0
      %p278 = scmp.eq.s32.totalorder %s22, 0
      %p279 = pnand %p277, %p278
      %p280 = pneg %p279
      %p281 = pnand %p276, %p280
      %p282 = pneg %p281
      // Predicated region
      $region37: #{cell_forward.1} parent=35 // pred_check
        _
      $region38: #{cell_forward.1} parent=35 // pred_check_branch
        %284 = sbr.rel (%p281) target = $region40
      $region39: #{cell_forward.1} parent=35 // pred_region
        %vm285 = vcmask 7168
        %286 = vst.msk [vmem:[#allocation2] sm:$0xff] %vm285, 0.0
        %287 = vst.msk [vmem:[#allocation3] sm:$0xff] %vm285, 0.0
      $region40: #{cell_forward.1} parent=35 // pred_fallthru
        _
      // Predicated region
      $region41: #{cell_forward.1} parent=35 // pred_check
        %p288 = pneg %p276
      $region42: #{cell_forward.1} parent=35 // pred_check_branch
        %290 = sbr.rel (%p288) target = $region44
      $region43: #{cell_forward.1} parent=35 // pred_region
        %v291 = vld [vmem:[%s0] sm:$0xff]
        %v292 = vld [vmem:[%s256] sm:$0xff]
        %v293 = vld [vmem:[%s256 + $0x8] sm:$0xff]
        %v294 = vld [vmem:[%s256 + $0x10] sm:$0xff]
        %v295 = vld [vmem:[%s256 + $0x18] sm:$0xff]
        %v296 = vld [vmem:[%s256 + $0x20] sm:$0xff]
        %v297 = vld [vmem:[%s256 + $0x28] sm:$0xff]
        %v298 = vld [vmem:[%s256 + $0x30] sm:$0xff]
        %v299 = vld [vmem:[%s256 + $0x38] sm:$0xff]
        %v300 = vld [vmem:[%s256 + $0x40] sm:$0xff]
        %v301 = vld [vmem:[%s256 + $0x48] sm:$0xff]
        %vm302 = vcmask 326656
        %v304 = vsel %vm302, %v291, 0
        %306 = vmatprep.subr.mxu0 %v293
        %307 = vmatpush1.msra.mxu0 %v292
        %308 = vmatprep.subr.mxu0 %v295
        %309 = vmatpush1.msra.mxu0 %v294
        %310 = vmatprep.subr.mxu0 %v297
        %311 = vmatpush1.msra.mxu0 %v296
        %312 = vmatprep.subr.mxu0 %v299
        %313 = vmatpush1.msra.mxu0 %v298
        %314 = vmatprep.subr.mxu0 %v301
        %315 = vmatpush1.msra.mxu0 %v300
        %316 = vmatprep.subr.mxu0 0.0
        %317 = vmatpush1.msra.mxu0 0.0
        %318 = vmatprep.subr.mxu0 0.0
        %319 = vmatpush1.msra.mxu0 0.0
        %320 = vmatprep.subr.mxu0 0.0
        %321 = vmatpush1.msra.mxu0 0.0
        %322 = vmatprep.subr.mxu0 0.0
        %323 = vmatpush1.msra.mxu0 0.0
        %324 = vmatprep.subr.mxu0 0.0
        %325 = vmatpush1.msra.mxu0 0.0
        %326 = vmatprep.subr.mxu0 0.0
        %327 = vmatpush1.msra.mxu0 0.0
        %328 = vmatprep.subr.mxu0 0.0
        %329 = vmatpush1.msra.mxu0 0.0
        %330 = vmatprep.subr.mxu0 0.0
        %331 = vmatpush1.msra.mxu0 0.0
        %332 = vmatprep.subr.mxu0 0.0
        %333 = vmatpush1.msra.mxu0 0.0
        %334 = vmatprep.subr.mxu0 0.0
        %335 = vmatpush1.msra.mxu0 0.0
        %336 = vmatprep.subr.mxu0 0.0
        %337 = vmatpush1.msra.mxu0 0.0
        %338 = vmatprep.subr.mxu0 0.0
        %339 = vmatpush1.msra.mxu0 0.0
        %340 = vmatprep.subr.mxu0 0.0
        %341 = vmatpush1.msra.mxu0 0.0
        %342 = vmatprep.subr.mxu0 0.0
        %343 = vmatpush1.msra.mxu0 0.0
        %344 = vmatprep.subr.mxu0 0.0
        %345 = vmatpush1.msra.mxu0 0.0
        %346 = vmatprep.subr.mxu0 0.0
        %347 = vmatpush1.msra.mxu0 0.0
        %348 = vmatprep.subr.mxu0 0.0
        %349 = vmatpush1.msra.mxu0 0.0
        %350 = vmatprep.subr.mxu0 0.0
        %351 = vmatpush1.msra.mxu0 0.0
        %352 = vmatprep.subr.mxu0 0.0
        %353 = vmatpush1.msra.mxu0 0.0
        %354 = vmatprep.subr.mxu0 0.0
        %355 = vmatpush1.msra.mxu0 0.0
        %356 = vmatprep.subr.mxu0 0.0
        %357 = vmatpush1.msra.mxu0 0.0
        %358 = vmatprep.subr.mxu0 0.0
        %359 = vmatpush1.msra.mxu0 0.0
        %360 = vmatprep.subr.mxu0 0.0
        %361 = vmatpush1.msra.mxu0 0.0
        %362 = vmatprep.subr.mxu0 0.0
        %363 = vmatpush1.msra.mxu0 0.0
        %364 = vmatprep.subr.mxu0 0.0
        %365 = vmatpush1.msra.mxu0 0.0
        %366 = vmatprep.subr.mxu0 0.0
        %367 = vmatpush1.msra.mxu0 0.0
        %368 = vmatprep.subr.mxu0 0.0
        %369 = vmatpush1.msra.mxu0 0.0
        %370 = vmatprep.mubr.f32.mxu0 0.0
        %371 = vmatmul.mubr.f32.gmra.mrb[0].mxu0 %v304
        %v372 = vpop.f32.mrb[0].mxu0
        %v373 = vadd.f32 0.0, %v372
        %v374 = vpop.f32.mrb[0].mxu0
        %v375 = vadd.f32 0.0, %v374
        %376 = vdwg.mxu0
        %s377 = smul.u32 %s275, 2
        %s378 = smul.addr %s377, 8
        %s379 = scalar_lea.vmem [#allocation4], %s378
        %380 = vst [vmem:[%s379] sm:$0xff] %v373
        %381 = vst [vmem:[%s379 + $0x8] sm:$0xff] %v375
        %s382 = smul.u32 %s22, 256
        %s383 = ssub.s32 256, %s382
        %p384 = scmp.lt.s32.totalorder %s383, 256
        %s385 = scalar_select %p384, %s383, 256
        %v386 = vlaneseq
        %v387 = vand.u32 %v386, 127
        %v388 = vadd.s32 %v387, 128
        %v389 = vstv %s385
        %vm390 = vcmp.lt.s32.totalorder %v387, %v389
        %vm391 = vcmp.lt.s32.totalorder %v388, %v389
        %s392 = scvt.s32.f32 %s385
        %v393 = vsel %vm390, %v373, 0.0
        %v394 = vsel %vm391, %v375, 0.0
        %v395 = vadd.f32 %v393, %v394
        %396 = vadd.xlane.f32.xlu0 %v395
        %v397 = vpop.xlane.xlu0 %396
        %v398 = vstv %s392
        %v399 = vrcp.pop %v398
        %v400 = vmul.f32 %v397, %v399
        %v401 = vsub.f32 %v373, %v400
        %v402 = vsub.f32 %v375, %v400
        %v403 = vsel %vm390, %v401, 0.0
        %v404 = vsel %vm391, %v402, 0.0
        %v405 = vmul.f32 %v403, %v403
        %v406 = vmul.f32 %v404, %v404
        %v407 = vadd.f32 %v405, %v406
        %408 = vadd.xlane.f32.xlu0 %v407
        %v409 = vpop.xlane.xlu0 %408
        %s410 = smul.u32 %s21, 256
        %s411 = sadd.s32 %s410, %s382
        %s412 = scvt.s32.f32 %s411
        %v413 = vld [vmem:[#allocation2] sm:$0xff]
        %s414 = smax.f32 %s412, 1.0
        %v415 = vstv %s414
        %v416 = vrcp.pop %v415
        %v417 = vmul.f32 %v413, %v416
        %v418 = vsub.f32 %v400, %v417
        %v419 = vld [vmem:[#allocation3] sm:$0xff]
        %v420 = vadd.f32 %v419, %v409
        %v421 = vmul.f32 %v418, %v418
        %s422 = smul.f32 %s412, %s392
        %s423 = sadd.f32 %s412, %s392
        %v424 = vstv %s423
        %v425 = vrcp.pop %v424
        %s426 = vtos %v425
        %s427 = smul.f32 %s422, %s426
        %v428 = vstv %s427
        %v429 = vmul.f32 %v421, %v428
        %v430 = vadd.f32 %v420, %v429
        %vm431 = vcmask 7168
        %432 = vst.msk [vmem:[#allocation3] sm:$0xff] %vm431, %v430
        %v433 = vld [vmem:[#allocation2] sm:$0xff]
        %v434 = vadd.f32 %v433, %v397
        %435 = vst.msk [vmem:[#allocation2] sm:$0xff] %vm431, %v434
      $region44: #{cell_forward.1} parent=35 // pred_fallthru
        _
      %p436 = scmp.eq.s32.totalorder %s20, 1
      // Predicated region
      $region45: #{cell_forward.1} parent=35 // pred_check
        %p437 = pneg %p436
      $region46: #{cell_forward.1} parent=35 // pred_check_branch
        %439 = sbr.rel (%p437) target = $region48
      $region47: #{cell_forward.1} parent=35 // pred_region
        %v440 = vld [vmem:[#allocation2] sm:$0xff]
        %v441 = vrcp.pop 512.0
        %v442 = vmul.f32 %v440, %v441
        %v443 = vld [vmem:[#allocation3] sm:$0xff]
        %v444 = vmul.f32 %v443, %v441
        %v445 = vld [vmem:[%s2] sm:$0xff]
        %v446 = vadd.f32 %v444, 1e-05
        %v447 = vrsqrt.pop %v446
        %v448 = vmul.f32 %v445, %v447
        %v449 = vld [vmem:[%s3] sm:$0xff]
        %v450 = vmul.f32 %v442, %v448
        %v451 = vsub.f32 %v449, %v450
        %s452 = smul.u32 %s275, 2
        %s453 = smul.addr %s452, 8
        %s454 = scalar_lea.vmem [#allocation4], %s453
        %v455 = vld [vmem:[%s454] sm:$0xff]
        %v456 = vld [vmem:[%s454 + $0x8] sm:$0xff]
        %458 = vset.pattern.permute.xlu0 0
        %459 = vperm.xlu0 %458, %v448
        %v460 = vpop.permute.xlu0 %459
        %v462 = vmul.f32 %v455, %v460
        %v463 = vmul.f32 %v456, %v460
        %465 = vset.pattern.permute.xlu0 0
        %466 = vperm.xlu0 %465, %v451
        %v467 = vpop.permute.xlu0 %466
        %v469 = vadd.f32 %v462, %v467
        %v470 = vadd.f32 %v463, %v467
        %471 = vst [vmem:[%s271] sm:$0xff] %v469
        %472 = vst [vmem:[%s271 + $0x8] sm:$0xff] %v470
      $region48: #{cell_forward.1} parent=35 // pred_fallthru
        _
      %s473 = smul.u32 %s21, %s20
      %s474 = smul.u32 %s22, %s20
      %s475 = smul.u32 2, %s474
      %p476 = scmp.lt.s32.totalorder %s473, 1
      %s477 = scalar_select %p476, %s473, 1
      %p478 = scmp.lt.s32.totalorder %s475, 1
      %s479 = scalar_select %p478, %s475, 1
      %s480 = smul.addr %s477, 2
      %s481 = sadd.s32 %s479, %s480
      %s482 = smul.addr %s481, 8
      %s483 = scalar_lea.vmem %s4, %s482
      // Predicated region
      $region49: #{cell_forward.1} parent=35 // pred_check
        %p484 = pneg %p155
      $region50: #{cell_forward.1} parent=35 // pred_check_branch
        %486 = sbr.rel (%p484) target = $region52
      $region51: #{cell_forward.1} parent=35 // pred_region
        %s487 = smul.u32 %s21, %s20
        %s488 = smul.u32 %s22, %s20
        %s489 = smul.u32 2, %s488
      $region52: #{cell_forward.1} parent=35 // pred_fallthru
        _
    $region36: #{cell_forward.1} parent=5 // pred_fallthru
      _
    %p490 = scmp.le.s32.totalorder 2, %s10
    // Predicated region
    $region53: #{cell_forward.1} parent=5 // pred_check
      %p491 = pneg %p490
    $region54: #{cell_forward.1} parent=5 // pred_check_branch
      %493 = sbr.rel (%p491) target = $region56
    $region55: #{cell_forward.1} parent=5 // pred_region
      %s494 = ssub.s32 %s10, 2
      // Predicated region
      $region57: #{cell_forward.1} parent=55 // pred_check
        %p495 = pneg %p161
      $region58: #{cell_forward.1} parent=55 // pred_check_branch
        %497 = sbr.rel (%p495) target = $region60
      $region59: #{cell_forward.1} parent=55 // pred_region
        %s498 = smul.u32 %s24, %s23
        %s499 = smul.u32 %s25, %s23
        %s500 = smul.u32 2, %s499
        %p501 = scmp.lt.s32.totalorder %s498, 1
        %s502 = scalar_select %p501, %s498, 1
        %p503 = scmp.lt.s32.totalorder %s500, 1
        %s504 = scalar_select %p503, %s500, 1
        %s505 = smul.addr %s502, 2
        %s506 = sadd.s32 %s504, %s505
        %s507 = smul.addr %s506, 8
        %s508 = scalar_lea.vmem %s4, %s507
      $region60: #{cell_forward.1} parent=55 // pred_fallthru
        _
    $region56: #{cell_forward.1} parent=5 // pred_fallthru
      _
  $region6: #{cell_forward.1} parent=0 // loop_footer
    %s14 = sadd.s32 1, %s10
  $region7: #{cell_forward.1} parent=0 // loop_footer_branch
    %9 = sbr.rel target = $region3
  $region8: #{cell_forward.1} parent=0 // loop_exit
    _

</llo_original>
